<compile_context>
chip_gen: v6e
topology: v6e:2x2x1
jax: 0.10.0
libtpu: 0.0.40
codegen_flags: <defaults>
</compile_context>

<pallas_src>
import functools

import jax
import jax.numpy as jnp
from jax import lax
from jax.experimental import pallas as pl
from jax.experimental.pallas import tpu as pltpu

EPS = 1e-5
_MIN_SPLIT_BLOCK_BYTES = 512 * 1024   # only split a length-1 parallel axis if halves stay this big


def _round_up(v, m):
    return (v + m - 1) // m * m


def _vmem_limit_bytes():
    """Generation-aware scoped-VMEM request (~3/4 of per-core physical VMEM)."""
    cap = 64 * 1024 * 1024            # safe floor: v7x physical; lower bound for v5e/v6e
    try:
        info = pltpu.get_tpu_info()
        c = getattr(info, "vmem_capacity_bytes", None)
        if c:
            cap = int(c)
    except Exception:
        pass
    return min(int(cap * 3 // 4), 112 * 1024 * 1024)


# --------------------------------------------------------------------------
# Fast path: full-N column strip per block; stats + normalize in one pass.
# One HBM read + one write per element.  Centered variance is free here
# (strip resident in VMEM) and more accurate than E[x^2] - mean^2.
# --------------------------------------------------------------------------
def _seqbn_onepass_kernel(x_ref, gamma_ref, beta_ref, o_ref):
    x = x_ref[...].astype(jnp.float32)                      # (N, TD)
    inv_n = 1.0 / x.shape[0]
    mean = jnp.sum(x, axis=0, keepdims=True) * inv_n        # (1, TD)
    xc = x - mean
    var = jnp.sum(xc * xc, axis=0, keepdims=True) * inv_n   # biased var
    scale = lax.rsqrt(var + EPS) * gamma_ref[...]           # rsqrt on EUP; fold gamma
    o_ref[...] = (xc * scale + beta_ref[...]).astype(o_ref.dtype)


# --------------------------------------------------------------------------
# Fallback pass A: N-tiled reduction -> per-partition partial sum / sumsq.
# Grid = (n_part, row_blocks): partition axis "parallel" (keeps both v7x TCs
# busy), row-block axis "arbitrary" (reduction into VMEM scratch).  Blocks are
# full feature width => fully contiguous HBM reads.
# --------------------------------------------------------------------------
def _seqbn_stats_kernel(x_ref, sum_ref, sq_ref, acc_sum, acc_sq, *,
                        n_rows, tn, blocks_per_part, mask_rows):
    p = pl.program_id(0)
    i = pl.program_id(1)

    @pl.when(i == 0)
    def _():
        acc_sum[...] = jnp.zeros_like(acc_sum)
        acc_sq[...] = jnp.zeros_like(acc_sq)

    x = x_ref[...].astype(jnp.float32)                      # (TN, D)
    if mask_rows:
        row = (p * blocks_per_part + i) * tn + lax.broadcasted_iota(
            jnp.int32, x.shape, 0)
        x = jnp.where(row < n_rows, x, 0.0)                 # zero rows past N (and
                                                            # any clamped duplicate block)
    acc_sum[...] += jnp.sum(x, axis=0, keepdims=True)
    acc_sq[...] += jnp.sum(x * x, axis=0, keepdims=True)

    @pl.when(i == pl.num_programs(1) - 1)
    def _():
        sum_ref[0] = acc_sum[...]
        sq_ref[0] = acc_sq[...]


# --------------------------------------------------------------------------
# Fallback pass B: streaming normalize, fully parallel, full feature width.
# --------------------------------------------------------------------------
def _seqbn_normalize_kernel(x_ref, scale_ref, shift_ref, o_ref):
    x = x_ref[...].astype(jnp.float32)
    o_ref[...] = (x * scale_ref[...] + shift_ref[...]).astype(o_ref.dtype)


def seq_bn(x, gamma, beta, *, onepass_budget_bytes=None, two_pass_tn=None):
    """x: (..., d_model); gamma/beta: (d_model,). Returns same shape as x."""
    d = x.shape[-1]
    assert gamma.shape == (d,) and beta.shape == (d,)
    orig_shape = x.shape

    flat_x = x.reshape(-1, d)          # no jnp.pad: avoids an extra HBM pass over x
    n = flat_x.shape[0]
    x_item = jnp.dtype(flat_x.dtype).itemsize

    gamma2 = gamma.reshape(1, d).astype(jnp.float32)
    beta2 = beta.reshape(1, d).astype(jnp.float32)

    vmem_limit = _vmem_limit_bytes()
    # Working set per block element: 2x double-buffered in, 2x out, ~3 f32 temps.
    bpe = 4 * x_item + 12
    budget = vmem_limit if onepass_budget_bytes is None else onepass_budget_bytes

    # Lane-tile candidates: divisors of d that are multiples of 128 (lane-dense
    # unmasked vst), else the full ragged width (block dim == array dim is legal;
    # the ragged lane tail just gets a masked store).
    if d % 128 == 0:
        cands = [t for t in range(d, 0, -128) if d % t == 0]
    else:
        cands = [d]
    fitting = [t for t in cands if n * t * bpe <= budget]

    if fitting:
        td = fitting[0]                                     # widest contiguous strip
        # v7x megacore: prefer a >=2-long "parallel" grid axis when the halved
        # block still amortizes the ~0.35us per-step cost (neutral on v5e/v6e).
        if d // td == 1 and len(fitting) > 1 and \
                n * fitting[1] * x_item >= _MIN_SPLIT_BLOCK_BYTES:
            td = fitting[1]
        out = pl.pallas_call(
            _seqbn_onepass_kernel,
            out_shape=jax.ShapeDtypeStruct((n, d), x.dtype),
            grid_spec=pltpu.PrefetchScalarGridSpec(
                num_scalar_prefetch=0,
                grid=(d // td,),
                in_specs=[
                    pl.BlockSpec((n, td), lambda j: (0, j)),
                    pl.BlockSpec((1, td), lambda j: (0, j)),
                    pl.BlockSpec((1, td), lambda j: (0, j)),
                ],
                out_specs=pl.BlockSpec((n, td), lambda j: (0, j)),
            ),
            compiler_params=pltpu.CompilerParams(
                dimension_semantics=("parallel",),
                vmem_limit_bytes=vmem_limit),
        )(flat_x, gamma2, beta2)
    else:
        # ---------------- two-pass fallback (very large N) ----------------
        # Full-width (tn, d) blocks -> contiguous HBM DMAs; tn sized so each
        # block fills as much of the scoped-VMEM budget as possible.
        tn_fit = max(8, (vmem_limit // max(1, d * bpe)) // 8 * 8)
        if two_pass_tn is not None:
            tn_fit = max(8, _round_up(two_pass_tn, 8))
        tn = min(tn_fit, _round_up(n, 8))
        n_blocks = pl.cdiv(n, tn)
        n_part = 2 if n_blocks >= 2 else 1
        bpp = pl.cdiv(n_blocks, n_part)
        # A virtual block index may run one past the end when n_blocks is odd;
        # clamp it in the index_map (its rows are fully masked in-kernel).
        def x_stats_map(p, i):
            return (jnp.minimum(p * bpp + i, n_blocks - 1), 0)

        mask_rows = (n % tn != 0) or (n_part * bpp != n_blocks)

        part_sum, part_sq = pl.pallas_call(
            functools.partial(_seqbn_stats_kernel, n_rows=n, tn=tn,
                              blocks_per_part=bpp, mask_rows=mask_rows),
            out_shape=(jax.ShapeDtypeStruct((n_part, 1, d), jnp.float32),
                       jax.ShapeDtypeStruct((n_part, 1, d), jnp.float32)),
            grid_spec=pltpu.PrefetchScalarGridSpec(
                num_scalar_prefetch=0,
                grid=(n_part, bpp),
                in_specs=[pl.BlockSpec((tn, d), x_stats_map)],
                out_specs=[
                    pl.BlockSpec((1, 1, d), lambda p, i: (p, 0, 0)),
                    pl.BlockSpec((1, 1, d), lambda p, i: (p, 0, 0)),
                ],
                scratch_shapes=[pltpu.VMEM((1, d), jnp.float32),
                                pltpu.VMEM((1, d), jnp.float32)],
            ),
            compiler_params=pltpu.CompilerParams(
                dimension_semantics=("parallel", "arbitrary"),
                vmem_limit_bytes=vmem_limit),
        )(flat_x)

        # Tiny (1, d) epilogue in plain XLA: combine partitions, fold affine.
        # TODO(synk): E[x^2]-mean^2 can lose precision when |mean| >> std; a
        #             pivot-shifted accumulation would fix it if ever needed.
        mean = jnp.sum(part_sum, axis=0) / n                       # (1, d)
        var = jnp.maximum(jnp.sum(part_sq, axis=0) / n - mean * mean, 0.0)
        scale = lax.rsqrt(var + EPS) * gamma2
        shift = beta2 - mean * scale

        out = pl.pallas_call(
            _seqbn_normalize_kernel,
            out_shape=jax.ShapeDtypeStruct((n, d), x.dtype),
            grid_spec=pltpu.PrefetchScalarGridSpec(
                num_scalar_prefetch=0,
                grid=(n_blocks,),
                in_specs=[
                    pl.BlockSpec((tn, d), lambda i: (i, 0)),
                    pl.BlockSpec((1, d), lambda i: (0, 0)),
                    pl.BlockSpec((1, d), lambda i: (0, 0)),
                ],
                out_specs=pl.BlockSpec((tn, d), lambda i: (i, 0)),
            ),
            compiler_params=pltpu.CompilerParams(
                dimension_semantics=("parallel",),
                vmem_limit_bytes=vmem_limit),
        )(flat_x, scale, shift)

    return out.reshape(orig_shape)


def _reference(x, gamma, beta):
    d = x.shape[-1]
    flat = x.reshape(-1, d).astype(jnp.float32)
    mean = flat.mean(axis=0, keepdims=True)
    var = ((flat - mean) ** 2).mean(axis=0, keepdims=True)
    y = (flat - mean) / jnp.sqrt(var + EPS) * gamma + beta
    return y.reshape(x.shape).astype(x.dtype)


if __name__ == "__main__":
    key = jax.random.PRNGKey(0)
    k1, k2, k3, kg, kb = jax.random.split(key, 5)

    # Case 1: typical SeqBN input (seq, batch, d_model) with ragged d_model=32.
    # One-pass path; block == full array, no padding of x anywhere.
    seq, batch, d_model = 8, 2, 32
    x = jax.random.normal(k1, (seq, batch, d_model), dtype=jnp.float32)
    gamma = 1.0 + 0.1 * jax.random.normal(kg, (d_model,), dtype=jnp.float32)
    beta = 0.1 * jax.random.normal(kb, (d_model,), dtype=jnp.float32)
    out = seq_bn(x, gamma, beta)
    jax.block_until_ready(out)
    ref = _reference(x, gamma, beta)
    assert out.shape == x.shape
    assert jnp.allclose(out, ref, atol=1e-4, rtol=1e-4), (
        float(jnp.max(jnp.abs(out - ref))))

    # Case 2: forced two-pass fallback, ragged N (111 rows, tn=16 -> 7 row
    # blocks, 2 partitions, one clamped + fully-masked virtual block).
    seq2, batch2, d2 = 37, 3, 64
    x2 = jax.random.normal(k2, (seq2, batch2, d2), dtype=jnp.float32)
    g2 = 1.0 + 0.1 * jax.random.normal(kg, (d2,), dtype=jnp.float32)
    b2 = 0.1 * jax.random.normal(kb, (d2,), dtype=jnp.float32)
    out2 = seq_bn(x2, g2, b2, onepass_budget_bytes=0, two_pass_tn=16)
    jax.block_until_ready(out2)
    ref2 = _reference(x2, g2, b2)
    assert out2.shape == x2.shape
    assert jnp.allclose(out2, ref2, atol=1e-4, rtol=1e-4), (
        float(jnp.max(jnp.abs(out2 - ref2))))

    # Case 3: d_model multiple of 128 with a tight budget so the one-pass path
    # tiles the lane axis (grid over two D strips of 128).
    seq3, batch3, d3 = 32, 4, 256
    x3 = jax.random.normal(k3, (seq3, batch3, d3), dtype=jnp.float32)
    g3 = 1.0 + 0.1 * jax.random.normal(kg, (d3,), dtype=jnp.float32)
    b3 = 0.1 * jax.random.normal(kb, (d3,), dtype=jnp.float32)
    out3 = seq_bn(x3, g3, b3, onepass_budget_bytes=600_000)
    jax.block_until_ready(out3)
    ref3 = _reference(x3, g3, b3)
    assert out3.shape == x3.shape
    assert jnp.allclose(out3, ref3, atol=1e-4, rtol=1e-4), (
        float(jnp.max(jnp.abs(out3 - ref3))))

    print("KERNEL_OK")
</pallas_src>

<mosaic_0001>
module attributes {stable_mosaic.version = 11 : i64} {
  func.func @_seqbn_onepass_kernel(%arg0: i32, %arg1: memref<16x32xf32, #tpu.memory_space<vmem>>, %arg2: memref<1x32xf32, #tpu.memory_space<vmem>>, %arg3: memref<1x32xf32, #tpu.memory_space<vmem>>, %arg4: memref<16x32xf32, #tpu.memory_space<vmem>>) attributes {dimension_semantics = [#tpu.dimension_semantics<parallel>], iteration_bounds = array<i64: 1>, scalar_prefetch = 0 : i64, scratch_operands = 0 : i64, tpu.core_type = #tpu.core_type<tc>, window_params = [{transform_indices = @transform_0, window_bounds = array<i64: 16, 32>}, {transform_indices = @transform_1, window_bounds = array<i64: 1, 32>}, {transform_indices = @transform_2, window_bounds = array<i64: 1, 32>}, {transform_indices = @transform_3, window_bounds = array<i64: 16, 32>}]} {
    %c0 = arith.constant 0 : index
    %c0_0 = arith.constant 0 : index
    %0 = vector.load %arg1[%c0, %c0_0] : memref<16x32xf32, #tpu.memory_space<vmem>>, vector<16x32xf32>
    %cst = arith.constant dense<0.000000e+00> : vector<32xf32>
    %1 = vector.multi_reduction <add>, %0, %cst [0] : vector<16x32xf32> to vector<32xf32>
    %2 = vector.shape_cast %1 : vector<32xf32> to vector<1x32xf32>
    %cst_1 = arith.constant 6.250000e-02 : f32
    %3 = vector.broadcast %cst_1 : f32 to vector<1x32xf32>
    %4 = arith.mulf %2, %3 : vector<1x32xf32>
    %5 = vector.broadcast %4 : vector<1x32xf32> to vector<16x32xf32>
    %6 = arith.subf %0, %5 : vector<16x32xf32>
    %7 = arith.mulf %6, %6 : vector<16x32xf32>
    %cst_2 = arith.constant dense<0.000000e+00> : vector<32xf32>
    %8 = vector.multi_reduction <add>, %7, %cst_2 [0] : vector<16x32xf32> to vector<32xf32>
    %9 = vector.shape_cast %8 : vector<32xf32> to vector<1x32xf32>
    %cst_3 = arith.constant 6.250000e-02 : f32
    %10 = vector.broadcast %cst_3 : f32 to vector<1x32xf32>
    %11 = arith.mulf %9, %10 : vector<1x32xf32>
    %cst_4 = arith.constant 9.99999974E-6 : f32
    %12 = vector.broadcast %cst_4 : f32 to vector<1x32xf32>
    %13 = arith.addf %11, %12 : vector<1x32xf32>
    %14 = math.rsqrt %13 : vector<1x32xf32>
    %c0_5 = arith.constant 0 : index
    %c0_6 = arith.constant 0 : index
    %15 = vector.load %arg2[%c0_5, %c0_6] : memref<1x32xf32, #tpu.memory_space<vmem>>, vector<1x32xf32>
    %16 = arith.mulf %14, %15 : vector<1x32xf32>
    %17 = vector.broadcast %16 : vector<1x32xf32> to vector<16x32xf32>
    %18 = arith.mulf %6, %17 : vector<16x32xf32>
    %c0_7 = arith.constant 0 : index
    %c0_8 = arith.constant 0 : index
    %19 = vector.load %arg3[%c0_7, %c0_8] : memref<1x32xf32, #tpu.memory_space<vmem>>, vector<1x32xf32>
    %20 = vector.broadcast %19 : vector<1x32xf32> to vector<16x32xf32>
    %21 = arith.addf %18, %20 : vector<16x32xf32>
    %c0_9 = arith.constant 0 : index
    %c0_10 = arith.constant 0 : index
    %22 = vector.load %arg4[%c0_9, %c0_10] : memref<16x32xf32, #tpu.memory_space<vmem>>, vector<16x32xf32>
    tpu.vector_store %arg4[%c0_9, %c0_10], %21 {strides = array<i32>} : memref<16x32xf32, #tpu.memory_space<vmem>>, vector<16x32xf32>,
    return
  }
  func.func @transform_0(%arg0: i32) -> (i32, i32) {
    %c0_i32 = arith.constant 0 : i32
    %c0_i32_0 = arith.constant 0 : i32
    return %c0_i32, %arg0 : i32, i32
  }
  func.func @transform_1(%arg0: i32) -> (i32, i32) {
    %c0_i32 = arith.constant 0 : i32
    %c0_i32_0 = arith.constant 0 : i32
    return %c0_i32, %arg0 : i32, i32
  }
  func.func @transform_2(%arg0: i32) -> (i32, i32) {
    %c0_i32 = arith.constant 0 : i32
    %c0_i32_0 = arith.constant 0 : i32
    return %c0_i32, %arg0 : i32, i32
  }
  func.func @transform_3(%arg0: i32) -> (i32, i32) {
    %c0_i32 = arith.constant 0 : i32
    %c0_i32_0 = arith.constant 0 : i32
    return %c0_i32, %arg0 : i32, i32
  }
}

</mosaic_0001>

<llo_original>
// kernel: tpu_custom_call.1
$region0: #{tpu_custom_call.1}
  #allocation0 [shape = 'u32[]', space=smem, size = 0x4, offset = 0x4, fixed_abs, tag = 'smem constant byte address 0x4 - core index']
  #allocation1 [shape = 'u32[144,128]{1,0:T(1,128)}', space=vmem, size = 0x12000, scoped, tag = 'internal scratch']
  %s0 = inlined_call_operand.hbm [shape: f32[16,32], index: 0, kind: input, shape index: {}]
  %s1 = inlined_call_operand.vmem [shape: f32[1,32], index: 1, kind: input, shape index: {}]
  %s2 = inlined_call_operand.vmem [shape: f32[1,32], index: 2, kind: input, shape index: {}]
  %s3 = inlined_call_operand.hbm [shape: f32[16,32], index: 3, kind: output, shape index: {}]
  %s4 = sld [smem:[#allocation0]]
  $region26: #{tpu_custom_call.1} parent=0
    _
  %s6 = ssub.s32 1, %s4
  %s7 = scalar_select 0, %s6, %s4
  $region1: #{tpu_custom_call.1} parent=0
    #allocation2 [shape = 'u8[8192]{0}', space=vmem, size = 0x2000, scoped, tag = 'input window, operand 0, single buffered']
    #allocation3 [shape = 's32[1]{0}', space=sflag, size = 0x4, scoped, tag = 'scoped memory for tpu_custom_call.1']
    #allocation4 [shape = 's32[1]{0}', space=sflag, size = 0x4, scoped, tag = 'scoped memory for tpu_custom_call.1']
    #allocation5 [shape = 'u8[8192]{0}', space=vmem, size = 0x2000, scoped, tag = 'output window, operand 0, single buffered']
    %8 = vsyncpa [#allocation3], 0
    %9 = vsyncpa [#allocation4], 0
    // Predicated region
    $region2: #{tpu_custom_call.1} parent=1 // pred_check
      _
    $region3: #{tpu_custom_call.1} parent=1 // pred_check_branch
      %11 = sbr.rel (0) target = $region5
    $region4: #{tpu_custom_call.1} parent=1 // pred_region
      %s13 = ssub.s32 256, 256
      %14 = vsyncadd [#allocation3], %s13
      %s15 = sshll.u32 [#allocation2], 4
      %s16 = int_to_ptr.vmem [resolvable:$true] %s15
      %21 = dma.hbm_to_vmem [thread:$0]  %s0, 256, %s16, [#allocation3], 128, 128, 8
    $region5: #{tpu_custom_call.1} parent=1 // pred_fallthru
      _
    // Predicated region
    $region6: #{tpu_custom_call.1} parent=1 // pred_check
      _
    $region7: #{tpu_custom_call.1} parent=1 // pred_check_branch
      %23 = sbr.rel (0) target = $region9
    $region8: #{tpu_custom_call.1} parent=1 // pred_region
      _
    $region9: #{tpu_custom_call.1} parent=1 // pred_fallthru
      _
    // Predicated region
    $region10: #{tpu_custom_call.1} parent=1 // pred_check
      _
    $region11: #{tpu_custom_call.1} parent=1 // pred_check_branch
      %25 = sbr.rel (0) target = $region13
    $region12: #{tpu_custom_call.1} parent=1 // pred_region
      _
    $region13: #{tpu_custom_call.1} parent=1 // pred_fallthru
      _
    // Predicated region
    $region14: #{tpu_custom_call.1} parent=1 // pred_check
      _
    $region15: #{tpu_custom_call.1} parent=1 // pred_check_branch
      %27 = sbr.rel (0) target = $region17
    $region16: #{tpu_custom_call.1} parent=1 // pred_region
      %28 = dma.done [#allocation3], 256
    $region17: #{tpu_custom_call.1} parent=1 // pred_fallthru
      _
    %v29 = vld [vmem:[#allocation2] sm:$0xff]
    %v30 = vld [vmem:[#allocation2 + $0x8] sm:$0xff]
    %vm31 = vcmask 261120
    %v32 = vsel %vm31, %v29, 0.0
    %v33 = vsel %vm31, %v30, 0.0
    %v34 = vadd.f32 %v32, %v33
    %v35 = vrot.slane %v34, 4
    %v36 = vadd.f32 %v34, %v35
    %v37 = vrot.slane %v36, 2
    %v38 = vadd.f32 %v36, %v37
    %v39 = vrot.slane %v38, 1
    %v40 = vadd.f32 %v38, %v39
    %v41 = vmul.f32 %v40, 0.0625
    %v42 = vsub.f32 %v29, %v41
    %v43 = vsub.f32 %v30, %v41
    %v44 = vmul.f32 %v42, %v42
    %v45 = vmul.f32 %v43, %v43
    %v46 = vsel %vm31, %v44, 0.0
    %v47 = vsel %vm31, %v45, 0.0
    %v48 = vadd.f32 %v46, %v47
    %v49 = vrot.slane %v48, 4
    %v50 = vadd.f32 %v48, %v49
    %v51 = vrot.slane %v50, 2
    %v52 = vadd.f32 %v50, %v51
    %v53 = vrot.slane %v52, 1
    %v54 = vadd.f32 %v52, %v53
    %v55 = vmul.f32 %v54, 0.0625
    %v56 = vadd.f32 %v55, 1e-05
    %v57 = vrsqrt.pop %v56
    %v58 = vld [vmem:[%s1] sm:$0x1]
    %v59 = vmul.f32 %v57, %v58
    %v60 = vlaneseq
    %v61 = vshrl.u32 %v60, 7
    %v62 = vsub.s32 0, %v61
    %v63 = vrot.slane %v59, %v62
    %v64 = vmul.f32 %v42, %v63
    %v65 = vmul.f32 %v43, %v63
    %v66 = vld [vmem:[%s2] sm:$0x1]
    %v68 = vlaneseq
    %v69 = vshrl.u32 %v68, 7
    %v70 = vsub.s32 0, %v69
    %v71 = vrot.slane %v66, %v70
    %v73 = vadd.f32 %v64, %v71
    %v74 = vadd.f32 %v65, %v71
    %75 = vst.msk [vmem:[#allocation5] sm:$0xff] %vm31, %v73
    %76 = vst.msk [vmem:[#allocation5 + $0x8] sm:$0xff] %vm31, %v74
    // Predicated region
    $region18: #{tpu_custom_call.1} parent=1 // pred_check
      _
    $region19: #{tpu_custom_call.1} parent=1 // pred_check_branch
      %78 = sbr.rel (0) target = $region21
    $region20: #{tpu_custom_call.1} parent=1 // pred_region
      %s80 = ssub.s32 256, 256
      %81 = vsyncadd [#allocation4], %s80
      %s82 = sshll.u32 [#allocation5], 4
      %s83 = int_to_ptr.vmem [resolvable:$true] %s82
      %88 = dma.vmem_to_hbm [thread:$0]  %s83, 256, %s3, [#allocation4], 128, 128, 8
    $region21: #{tpu_custom_call.1} parent=1 // pred_fallthru
      _
    // Predicated region
    $region22: #{tpu_custom_call.1} parent=1 // pred_check
      _
    $region23: #{tpu_custom_call.1} parent=1 // pred_check_branch
      %90 = sbr.rel (0) target = $region25
    $region24: #{tpu_custom_call.1} parent=1 // pred_region
      %91 = dma.done [#allocation4], 256
    $region25: #{tpu_custom_call.1} parent=1 // pred_fallthru
      _
    %92 = vsyncpa [#allocation3], 1
    %93 = vsyncpa [#allocation4], 1

</llo_original>
